<compile_context>
chip_gen: v6e
topology: v6e:2x2x1
jax: 0.10.0
libtpu: 0.0.40
codegen_flags: <defaults>
</compile_context>

<pallas_src>
import math
import functools

import jax
import jax.numpy as jnp
from jax.experimental import pallas as pl
from jax.experimental.pallas import tpu as pltpu

# ----------------------------- config (small, per-spec) ---------------------
BASE_FEAT_SIZE = 128                 # cfg.model.base_feat_size
NUM_CLASSES = (128, 64, 64)          # cfg.model.num_classes  (sum = 256)
OUT_FEATS = sum(NUM_CLASSES)


# ----------------------------- Pallas kernel --------------------------------
def _linear_bias_kernel(x_ref, w_ref, b_ref, o_ref):
    """o = x @ w + b.  bf16 operands -> f32 MXU accumulate -> f32 bias epilogue."""
    acc = jnp.dot(x_ref[...], w_ref[...], preferred_element_type=jnp.float32)
    o_ref[...] = (acc + b_ref[...]).astype(o_ref.dtype)


def linear_with_bias(x2d, w_in_out, bias_2d, out_dtype):
    """x2d: (M, K) bf16, w_in_out: (K, N) bf16 (pre-transposed from torch (N, K)),
    bias_2d: (1, N) f32 -> (M, N) in `out_dtype`.  Single pallas_call."""
    M, K = x2d.shape
    K2, N = w_in_out.shape
    assert K == K2 and bias_2d.shape == (1, N)

    # Whole weight (128x256 bf16 = 64 KiB) and bias stay resident; only tile M when it
    # is big enough to matter for VMEM / megacore.  At the spec sizes grid == (1,).
    if M > 512 and M % 256 == 0:
        tm = 256
    else:
        tm = M
    grid = (M // tm,)

    return pl.pallas_call(
        _linear_bias_kernel,
        out_shape=jax.ShapeDtypeStruct((M, N), out_dtype),
        grid_spec=pltpu.PrefetchScalarGridSpec(
            num_scalar_prefetch=0,
            grid=grid,
            in_specs=[
                pl.BlockSpec((tm, K), lambda i: (i, 0)),   # activation row tile
                pl.BlockSpec((K, N), lambda i: (0, 0)),    # full weight, resident
                pl.BlockSpec((1, N), lambda i: (0, 0)),    # full bias, resident
            ],
            out_specs=pl.BlockSpec((tm, N), lambda i: (i, 0)),  # lane-dense 256-wide slab
        ),
        compiler_params=pltpu.CompilerParams(
            dimension_semantics=("parallel",)),            # only matters when M is tiled
    )(x2d, w_in_out, bias_2d)


# ----------------------------- module wrapper --------------------------------
def init_params(key):
    """Mimics nn.Linear(base_feat, sum(num_classes)) init; weight is created in torch's
    (out, in) layout, transposed ONCE to (in, out) and stored as bf16 for the MXU.
    Bias stays f32 (epilogue math is f32) and is pre-reshaped to (1, OUT_FEATS)."""
    wkey, bkey = jax.random.split(key)
    bound = 1.0 / math.sqrt(BASE_FEAT_SIZE)
    w_torch = jax.random.uniform(wkey, (OUT_FEATS, BASE_FEAT_SIZE),
                                 minval=-bound, maxval=bound, dtype=jnp.float32)
    b = jax.random.uniform(bkey, (OUT_FEATS,),
                           minval=-bound, maxval=bound, dtype=jnp.float32)
    return {
        "w_in_out": jnp.transpose(w_torch).astype(jnp.bfloat16),  # (K, N) bf16, once
        "b2d": b.reshape(1, OUT_FEATS),                            # (1, N) f32, once
    }


@jax.jit
def mlp_decoder_forward(params, x):
    """x: (..., base_feat_size) -> tuple of logits split along the last dim into
    NUM_CLASSES-sized chunks (matches torch.split(logits, num_classes, dim=-1))."""
    lead = x.shape[:-1]
    K = x.shape[-1]
    M = math.prod(lead) if lead else 1            # static python int (shapes are static)
    x2d = x.reshape(M, K).astype(jnp.bfloat16)    # bf16 operand for the MXU

    logits = linear_with_bias(x2d, params["w_in_out"], params["b2d"], x.dtype)
    logits = logits.reshape(*lead, OUT_FEATS)

    # torch.split equivalent: cheap slices of the single lane-dense kernel output.
    outs = []
    start = 0
    for n in NUM_CLASSES:
        outs.append(jax.lax.slice_in_dim(logits, start, start + n, axis=-1))
        start += n
    return tuple(outs)


# ----------------------------- main ------------------------------------------
if __name__ == "__main__":
    key = jax.random.PRNGKey(0)
    pkey, xkey = jax.random.split(key)
    params = init_params(pkey)

    B, S = 2, 8
    x = jax.random.normal(xkey, (B, S, BASE_FEAT_SIZE), dtype=jnp.float32)

    logits_tuple = mlp_decoder_forward(params, x)
    jax.block_until_ready(logits_tuple)

    # Shape / sanity checks against the module semantics.
    assert len(logits_tuple) == len(NUM_CLASSES)
    for out, n in zip(logits_tuple, NUM_CLASSES):
        assert out.shape == (B, S, n)
        assert bool(jnp.all(jnp.isfinite(out)))

    # Numerical check against a plain-JAX reference with the SAME bf16 operands
    # (f32 accumulate), so only accumulation-order differences remain.
    x_bf = x.reshape(B * S, BASE_FEAT_SIZE).astype(jnp.bfloat16).astype(jnp.float32)
    w_f32 = params["w_in_out"].astype(jnp.float32)
    ref_full = jnp.dot(x_bf, w_f32, precision=jax.lax.Precision.HIGHEST) + params["b2d"]
    ref_full = ref_full.reshape(B, S, OUT_FEATS)
    got_full = jnp.concatenate(logits_tuple, axis=-1)
    assert bool(jnp.allclose(got_full, ref_full, atol=1e-3, rtol=1e-3))

    print("KERNEL_OK")
</pallas_src>

<mosaic_0001>
module attributes {stable_mosaic.version = 11 : i64} {
  func.func @_linear_bias_kernel(%arg0: i32, %arg1: memref<16x128xbf16, #tpu.memory_space<vmem>>, %arg2: memref<128x256xbf16, #tpu.memory_space<vmem>>, %arg3: memref<1x256xf32, #tpu.memory_space<vmem>>, %arg4: memref<16x256xf32, #tpu.memory_space<vmem>>) attributes {dimension_semantics = [#tpu.dimension_semantics<parallel>], iteration_bounds = array<i64: 1>, scalar_prefetch = 0 : i64, scratch_operands = 0 : i64, tpu.core_type = #tpu.core_type<tc>, window_params = [{transform_indices = @transform_0, window_bounds = array<i64: 16, 128>}, {pipeline_mode = #tpu.pipeline_mode<synchronous>, transform_indices = @transform_1, window_bounds = array<i64: 128, 256>}, {pipeline_mode = #tpu.pipeline_mode<synchronous>, transform_indices = @transform_2, window_bounds = array<i64: 1, 256>}, {transform_indices = @transform_3, window_bounds = array<i64: 16, 256>}]} {
    %c0 = arith.constant 0 : index
    %c0_0 = arith.constant 0 : index
    %0 = vector.load %arg1[%c0, %c0_0] : memref<16x128xbf16, #tpu.memory_space<vmem>>, vector<16x128xbf16>
    %c0_1 = arith.constant 0 : index
    %c0_2 = arith.constant 0 : index
    %1 = vector.load %arg2[%c0_1, %c0_2] : memref<128x256xbf16, #tpu.memory_space<vmem>>, vector<128x256xbf16>
    %cst = arith.constant dense<0.000000e+00> : vector<16x256xf32>
    %2 = tpu.matmul %0, %1, %cst {dimension_numbers = #tpu.dot_dimension_numbers<[1], [0], [0], [1], [0, 0, 1, 1], [], []>} : vector<16x128xbf16>, vector<128x256xbf16>, vector<16x256xf32> -> vector<16x256xf32>
    %c0_3 = arith.constant 0 : index
    %c0_4 = arith.constant 0 : index
    %3 = vector.load %arg3[%c0_3, %c0_4] : memref<1x256xf32, #tpu.memory_space<vmem>>, vector<1x256xf32>
    %4 = vector.broadcast %3 : vector<1x256xf32> to vector<16x256xf32>
    %5 = arith.addf %2, %4 : vector<16x256xf32>
    %c0_5 = arith.constant 0 : index
    %c0_6 = arith.constant 0 : index
    %6 = vector.load %arg4[%c0_5, %c0_6] : memref<16x256xf32, #tpu.memory_space<vmem>>, vector<16x256xf32>
    tpu.vector_store %arg4[%c0_5, %c0_6], %5 {strides = array<i32>} : memref<16x256xf32, #tpu.memory_space<vmem>>, vector<16x256xf32>,
    return
  }
  func.func @transform_0(%arg0: i32) -> (i32, i32) {
    %c0_i32 = arith.constant 0 : i32
    %c0_i32_0 = arith.constant 0 : i32
    return %arg0, %c0_i32 : i32, i32
  }
  func.func @transform_1(%arg0: i32) -> (i32, i32) {
    %c0_i32 = arith.constant 0 : i32
    %c0_i32_0 = arith.constant 0 : i32
    %c0_i32_1 = arith.constant 0 : i32
    return %c0_i32, %c0_i32_0 : i32, i32
  }
  func.func @transform_2(%arg0: i32) -> (i32, i32) {
    %c0_i32 = arith.constant 0 : i32
    %c0_i32_0 = arith.constant 0 : i32
    %c0_i32_1 = arith.constant 0 : i32
    return %c0_i32, %c0_i32_0 : i32, i32
  }
  func.func @transform_3(%arg0: i32) -> (i32, i32) {
    %c0_i32 = arith.constant 0 : i32
    %c0_i32_0 = arith.constant 0 : i32
    return %arg0, %c0_i32 : i32, i32
  }
}

</mosaic_0001>

<llo_original>
// kernel: mlp_decoder_forward.1
$region0: #{mlp_decoder_forward.1}
  #allocation0 [shape = 'u32[]', space=smem, size = 0x4, offset = 0x4, fixed_abs, tag = 'smem constant byte address 0x4 - core index']
  #allocation1 [shape = 'u32[144,128]{1,0:T(1,128)}', space=vmem, size = 0x12000, scoped, tag = 'internal scratch']
  %s0 = inlined_call_operand.vmem [shape: bf16[16,128], index: 0, kind: input, shape index: {}]
  %s1 = inlined_call_operand.hbm [shape: bf16[128,256], index: 1, kind: input, shape index: {}]
  %s2 = inlined_call_operand.vmem [shape: f32[1,256], index: 2, kind: input, shape index: {}]
  %s3 = inlined_call_operand.vmem [shape: f32[16,256], index: 3, kind: output, shape index: {}]
  %s4 = sld [smem:[#allocation0]]
  $region26: #{mlp_decoder_forward.1} parent=0
    _
  %s6 = ssub.s32 1, %s4
  %s7 = scalar_select 0, %s6, %s4
  $region1: #{mlp_decoder_forward.1} parent=0
    #allocation2 [shape = 'u8[65536]{0}', space=vmem, size = 0x10000, scoped, tag = 'input window, operand 1, single buffered']
    #allocation3 [shape = 's32[1]{0}', space=sflag, size = 0x4, scoped, tag = 'scoped memory for mlp_decoder_forward.1']
    %8 = vsyncpa [#allocation3], 0
    // Predicated region
    $region2: #{mlp_decoder_forward.1} parent=1 // pred_check
      _
    $region3: #{mlp_decoder_forward.1} parent=1 // pred_check_branch
      %10 = sbr.rel (0) target = $region5
    $region4: #{mlp_decoder_forward.1} parent=1 // pred_region
      _
    $region5: #{mlp_decoder_forward.1} parent=1 // pred_fallthru
      _
    // Predicated region
    $region6: #{mlp_decoder_forward.1} parent=1 // pred_check
      _
    $region7: #{mlp_decoder_forward.1} parent=1 // pred_check_branch
      %12 = sbr.rel (0) target = $region9
    $region8: #{mlp_decoder_forward.1} parent=1 // pred_region
      %s14 = ssub.s32 2048, 2048
      %15 = vsyncadd [#allocation3], %s14
      %s16 = sshll.u32 [#allocation2], 4
      %s17 = int_to_ptr.vmem [resolvable:$true] %s16
      %22 = dma.hbm_to_vmem [thread:$0]  %s1, 2048, %s17, [#allocation3], 128, 128, 8
    $region9: #{mlp_decoder_forward.1} parent=1 // pred_fallthru
      _
    // Predicated region
    $region10: #{mlp_decoder_forward.1} parent=1 // pred_check
      _
    $region11: #{mlp_decoder_forward.1} parent=1 // pred_check_branch
      %24 = sbr.rel (0) target = $region13
    $region12: #{mlp_decoder_forward.1} parent=1 // pred_region
      _
    $region13: #{mlp_decoder_forward.1} parent=1 // pred_fallthru
      _
    // Predicated region
    $region14: #{mlp_decoder_forward.1} parent=1 // pred_check
      _
    $region15: #{mlp_decoder_forward.1} parent=1 // pred_check_branch
      %26 = sbr.rel (0) target = $region17
    $region16: #{mlp_decoder_forward.1} parent=1 // pred_region
      %27 = dma.done [#allocation3], 2048
    $region17: #{mlp_decoder_forward.1} parent=1 // pred_fallthru
      _
    %v29 = vld [vmem:[%s0] sm:$0xf]
    %v30 = vld [vmem:[%s0 + $0x4] sm:$0xf]
    %v31 = vld [vmem:[#allocation2] sm:$0xff]
    %v32 = vld [vmem:[#allocation2 + $0x8] sm:$0xff]
    %v33 = vld [vmem:[#allocation2 + $0x10] sm:$0xff]
    %v34 = vld [vmem:[#allocation2 + $0x18] sm:$0xff]
    %v35 = vld [vmem:[#allocation2 + $0x20] sm:$0xff]
    %v36 = vld [vmem:[#allocation2 + $0x28] sm:$0xff]
    %v37 = vld [vmem:[#allocation2 + $0x30] sm:$0xff]
    %v38 = vld [vmem:[#allocation2 + $0x38] sm:$0xff]
    %v39 = vld [vmem:[#allocation2 + $0x40] sm:$0xff]
    %v40 = vld [vmem:[#allocation2 + $0x48] sm:$0xff]
    %v41 = vld [vmem:[#allocation2 + $0x50] sm:$0xff]
    %v42 = vld [vmem:[#allocation2 + $0x58] sm:$0xff]
    %v43 = vld [vmem:[#allocation2 + $0x60] sm:$0xff]
    %v44 = vld [vmem:[#allocation2 + $0x68] sm:$0xff]
    %v45 = vld [vmem:[#allocation2 + $0x70] sm:$0xff]
    %v46 = vld [vmem:[#allocation2 + $0x78] sm:$0xff]
    %v47 = vld [vmem:[%s2] sm:$0x3]
    %v49 = vlaneseq
    %v50 = vshrl.u32 %v49, 7
    %v51 = vsub.s32 0, %v50
    %v52 = vrot.slane %v47, %v51
    %v53 = vlaneseq
    %v54 = vshrl.u32 %v53, 7
    %v55 = vsub.s32 1, %v54
    %v56 = vrot.slane %v47, %v55
    %v61 = vunpack.c.l.b16 %v29
    %v62 = vunpack.c.l.b16 %v30
    %v63 = vpack.c.b16 %v62, %v61
    %v81 = vunpack.c.l.b16 %v31
    %v82 = vunpack.c.h.b16 %v31
    %v83 = vunpack.c.l.b16 %v32
    %v84 = vunpack.c.h.b16 %v32
    %v85 = vunpack.c.l.b16 %v33
    %v86 = vunpack.c.h.b16 %v33
    %v87 = vunpack.c.l.b16 %v34
    %v88 = vunpack.c.h.b16 %v34
    %v89 = vunpack.c.l.b16 %v35
    %v90 = vunpack.c.h.b16 %v35
    %v91 = vunpack.c.l.b16 %v36
    %v92 = vunpack.c.h.b16 %v36
    %v93 = vunpack.c.l.b16 %v37
    %v94 = vunpack.c.h.b16 %v37
    %v95 = vunpack.c.l.b16 %v38
    %v96 = vunpack.c.h.b16 %v38
    %v97 = vunpack.c.l.b16 %v39
    %v98 = vunpack.c.h.b16 %v39
    %v99 = vunpack.c.l.b16 %v40
    %v100 = vunpack.c.h.b16 %v40
    %v101 = vunpack.c.l.b16 %v41
    %v102 = vunpack.c.h.b16 %v41
    %v103 = vunpack.c.l.b16 %v42
    %v104 = vunpack.c.h.b16 %v42
    %v105 = vunpack.c.l.b16 %v43
    %v106 = vunpack.c.h.b16 %v43
    %v107 = vunpack.c.l.b16 %v44
    %v108 = vunpack.c.h.b16 %v44
    %v109 = vunpack.c.l.b16 %v45
    %v110 = vunpack.c.h.b16 %v45
    %v111 = vunpack.c.l.b16 %v46
    %v112 = vunpack.c.h.b16 %v46
    %v113 = vpack.c.b16 %v83, %v81
    %v114 = vpack.c.b16 %v84, %v82
    %v115 = vpack.c.b16 %v87, %v85
    %v116 = vpack.c.b16 %v88, %v86
    %v117 = vpack.c.b16 %v91, %v89
    %v118 = vpack.c.b16 %v92, %v90
    %v119 = vpack.c.b16 %v95, %v93
    %v120 = vpack.c.b16 %v96, %v94
    %v121 = vpack.c.b16 %v99, %v97
    %v122 = vpack.c.b16 %v100, %v98
    %v123 = vpack.c.b16 %v103, %v101
    %v124 = vpack.c.b16 %v104, %v102
    %v125 = vpack.c.b16 %v107, %v105
    %v126 = vpack.c.b16 %v108, %v106
    %v127 = vpack.c.b16 %v111, %v109
    %v128 = vpack.c.b16 %v112, %v110
    %145 = vmatprep.subr.bf16.mxu0 %v128
    %146 = vmatpush1.bf16.msra.mxu0 %v127
    %147 = vmatprep.subr.bf16.mxu0 %v126
    %148 = vmatpush1.bf16.msra.mxu0 %v125
    %149 = vmatprep.subr.bf16.mxu0 %v124
    %150 = vmatpush1.bf16.msra.mxu0 %v123
    %151 = vmatprep.subr.bf16.mxu0 %v122
    %152 = vmatpush1.bf16.msra.mxu0 %v121
    %153 = vmatprep.subr.bf16.mxu0 %v120
    %154 = vmatpush1.bf16.msra.mxu0 %v119
    %155 = vmatprep.subr.bf16.mxu0 %v118
    %156 = vmatpush1.bf16.msra.mxu0 %v117
    %157 = vmatprep.subr.bf16.mxu0 %v116
    %158 = vmatpush1.bf16.msra.mxu0 %v115
    %159 = vmatprep.subr.bf16.mxu0 %v114
    %160 = vmatpush1.bf16.msra.mxu0 %v113
    %161 = vmatprep.subr.bf16.mxu0 0
    %162 = vmatpush2.bf16.msra.mxu0 0
    %163 = vmatprep.subr.bf16.mxu0 0
    %164 = vmatpush2.bf16.msra.mxu0 0
    %165 = vmatprep.subr.bf16.mxu0 0
    %166 = vmatpush2.bf16.msra.mxu0 0
    %167 = vmatprep.subr.bf16.mxu0 0
    %168 = vmatpush2.bf16.msra.mxu0 0
    %169 = vmatprep.subr.bf16.mxu0 0
    %170 = vmatpush2.bf16.msra.mxu0 0
    %171 = vmatprep.subr.bf16.mxu0 0
    %172 = vmatpush2.bf16.msra.mxu0 0
    %173 = vmatprep.subr.bf16.mxu0 0
    %174 = vmatpush2.bf16.msra.mxu0 0
    %175 = vmatprep.subr.bf16.mxu0 0
    %176 = vmatpush2.bf16.msra.mxu0 0
    %177 = vmatprep.mubr.bf16.mxu0 0
    %178 = vmatmul.mubr.bf16.gmra.mxu0 %v63
    %v179 = vpop.f32.mrf.mxu0
    %v180 = vadd.f32 %v52, %v179
    %v181 = vpop.f32.mrf.mxu0
    %v182 = vadd.f32 %v56, %v181
    %v183 = vpop.f32.mrf.mxu0
    %v184 = vadd.f32 %v52, %v183
    %v185 = vpop.f32.mrf.mxu0
    %v186 = vadd.f32 %v56, %v185
    %187 = vdwg.mxu0
    %188 = vst [vmem:[%s3] sm:$0xff] %v180
    %189 = vst [vmem:[%s3 + $0x8] sm:$0xff] %v182
    %190 = vst [vmem:[%s3 + $0x10] sm:$0xff] %v184
    %191 = vst [vmem:[%s3 + $0x18] sm:$0xff] %v186
    // Predicated region
    $region18: #{mlp_decoder_forward.1} parent=1 // pred_check
      _
    $region19: #{mlp_decoder_forward.1} parent=1 // pred_check_branch
      %193 = sbr.rel (0) target = $region21
    $region20: #{mlp_decoder_forward.1} parent=1 // pred_region
      _
    $region21: #{mlp_decoder_forward.1} parent=1 // pred_fallthru
      _
    // Predicated region
    $region22: #{mlp_decoder_forward.1} parent=1 // pred_check
      _
    $region23: #{mlp_decoder_forward.1} parent=1 // pred_check_branch
      %195 = sbr.rel (0) target = $region25
    $region24: #{mlp_decoder_forward.1} parent=1 // pred_region
      _
    $region25: #{mlp_decoder_forward.1} parent=1 // pred_fallthru
      _
    %196 = vsyncpa [#allocation3], 1

</llo_original>
